<compile_context>
chip_gen: v7x
topology: tpu7x:2x2x1
jax: 0.10.0
libtpu: 0.0.40
codegen_flags: <defaults>
</compile_context>

<pallas_src>
import jax
import jax.numpy as jnp
from jax.experimental import pallas as pl
from jax.experimental.pallas import tpu as pltpu


def _round_up(x, m):
    return ((x + m - 1) // m) * m


# ---------------------------------------------------------------------------
# Pallas kernel: one (row-tile i, contraction-tile k) step of
#   O[i] = sum_k A_hat[i, k] @ H[k]  + b
# ---------------------------------------------------------------------------
def _gcn_aggregate_kernel(a_ref, h_ref, b_ref, o_ref, acc_ref):
    @pl.when(pl.program_id(1) == 0)
    def _init():
        acc_ref[...] = jnp.zeros_like(acc_ref)

    acc_ref[...] += jnp.dot(a_ref[...], h_ref[...],
                            preferred_element_type=jnp.float32)

    @pl.when(pl.program_id(1) == pl.num_programs(1) - 1)
    def _finalize():
        o_ref[...] = acc_ref[...] + b_ref[...]


# ---------------------------------------------------------------------------
# JAX glue
# ---------------------------------------------------------------------------
def gcn_normalized_adjacency(edge_index, num_nodes):
    """Dense D^{-1/2}(A+I)D^{-1/2}; A[target, source] = 1 per edge."""
    # TODO(synk): for very large sparse graphs a CSR gather kernel (scalar
    # prefetch page table) would avoid materializing the dense N x N matrix.
    src = edge_index[0]
    dst = edge_index[1]
    a = jnp.zeros((num_nodes, num_nodes), jnp.float32)
    a = a.at[dst, src].add(1.0)                          # messages flow src -> dst
    a = a + jnp.eye(num_nodes, dtype=jnp.float32)        # self loops
    deg = jnp.sum(a, axis=1)                             # in-degree incl. self loop
    dinv = jnp.where(deg > 0.0, jax.lax.rsqrt(deg), 0.0)
    return a * dinv[:, None] * dinv[None, :]


def _pallas_gcn_aggregate(a_hat, h, bias, *, tile_n=512):
    """O = A_hat @ H + bias via the tiled Pallas kernel (bf16 stream, f32 acc)."""
    n = a_hat.shape[0]
    f2 = h.shape[1]
    f2p = _round_up(f2, 128)                 # lane-dense output width

    t = min(tile_n, _round_up(n, 128))       # one tile size for rows & contraction
    n_pad = _round_up(n, t)

    # Pad + cast the streamed operands to bf16 (zero padding is exact).
    a_p = jnp.pad(a_hat.astype(jnp.bfloat16),
                  ((0, n_pad - n), (0, n_pad - n)))
    h_p = jnp.pad(h.astype(jnp.bfloat16),
                  ((0, n_pad - n), (0, f2p - f2)))
    b_p = jnp.pad(bias.astype(jnp.float32), (0, f2p - f2)).reshape(1, f2p)

    grid = (n_pad // t, n_pad // t)
    flops = 2 * n_pad * n_pad * f2p
    bytes_accessed = (a_p.size * 2                  # A_hat streamed once (bf16)
                      + h_p.size * 2 * grid[0]      # H re-read per row tile
                      + n_pad * f2p * 4)            # output written once (f32)

    out = pl.pallas_call(
        _gcn_aggregate_kernel,
        out_shape=jax.ShapeDtypeStruct((n_pad, f2p), jnp.float32),
        grid_spec=pltpu.PrefetchScalarGridSpec(
            num_scalar_prefetch=0,
            grid=grid,
            in_specs=[
                pl.BlockSpec((t, t), lambda i, k: (i, k)),      # A_hat tile
                pl.BlockSpec((t, f2p), lambda i, k: (k, 0)),    # H tile
                pl.BlockSpec((1, f2p), lambda i, k: (0, 0)),    # bias (resident)
            ],
            out_specs=pl.BlockSpec((t, f2p), lambda i, k: (i, 0)),
            scratch_shapes=[pltpu.VMEM((t, f2p), jnp.float32)],
        ),
        compiler_params=pltpu.CompilerParams(
            dimension_semantics=("parallel", "arbitrary")),
        cost_estimate=pl.CostEstimate(flops=flops, transcendentals=0,
                                      bytes_accessed=bytes_accessed),
    )(a_p, h_p, b_p)

    return out[:n, :f2]


def cmap_encoder_forward(x, edge_index, w1, b1, w2, b2, *, tile_n=512,
                         min_pallas_nodes=0):
    """Returns (mu, logstd) = (GCNConv1(x, ei), GCNConv_logstd(x, ei))."""
    n, _ = x.shape
    f_out = w1.shape[1]

    a_hat = gcn_normalized_adjacency(edge_index, n)

    # Fuse both branches into one wide matmul chain.
    w = jnp.concatenate([w1, w2], axis=1)                  # [F_in, 2*F_out]
    b = jnp.concatenate([b1, b2], axis=0)                  # [2*F_out]
    h = jnp.dot(x, w, preferred_element_type=jnp.float32)  # tiny prologue (XLA)

    if n < min_pallas_nodes:
        # Toy graphs: fused XLA beats any kernel-launch overhead.
        o = jnp.dot(a_hat, h, preferred_element_type=jnp.float32) + b[None, :]
    else:
        o = _pallas_gcn_aggregate(a_hat, h, b, tile_n=tile_n)

    return o[:, :f_out], o[:, f_out:]


def _reference_forward(x, edge_index, w1, b1, w2, b2):
    """Pure-f32 JAX reference (matches PyG GCNConv defaults)."""
    a_hat = gcn_normalized_adjacency(edge_index, x.shape[0])
    mu = a_hat @ (x @ w1) + b1[None, :]
    logstd = a_hat @ (x @ w2) + b2[None, :]
    return mu, logstd


def _glorot(key, shape):
    fan_in, fan_out = shape
    limit = jnp.sqrt(6.0 / (fan_in + fan_out))
    return jax.random.uniform(key, shape, jnp.float32, -limit, limit)


if __name__ == "__main__":
    # Small shapes consistent with the spec (out_channels = 200).
    N, F_IN, F_OUT = 64, 16, 200

    key = jax.random.PRNGKey(0)
    kx, kw1, kw2 = jax.random.split(key, 3)

    # Node features [N, F_IN]
    x = jax.random.normal(kx, (N, F_IN), jnp.float32)

    # Undirected ring graph as edge_index [2, E]
    src = jnp.arange(N, dtype=jnp.int32)
    dst = (src + 1) % N
    edge_index = jnp.stack([jnp.concatenate([src, dst]),
                            jnp.concatenate([dst, src])], axis=0)

    # Deterministic parameter init (GCNConv: glorot weight, zero bias)
    w1 = _glorot(kw1, (F_IN, F_OUT))
    b1 = jnp.zeros((F_OUT,), jnp.float32)
    w2 = _glorot(kw2, (F_IN, F_OUT))
    b2 = jnp.zeros((F_OUT,), jnp.float32)

    # Force the Pallas path even at this toy size (min_pallas_nodes=0 default).
    mu, logstd = cmap_encoder_forward(x, edge_index, w1, b1, w2, b2)
    jax.block_until_ready((mu, logstd))

    # Validate against the f32 reference (bf16 streaming -> loose tolerance).
    mu_ref, logstd_ref = _reference_forward(x, edge_index, w1, b1, w2, b2)
    assert mu.shape == (N, F_OUT) and logstd.shape == (N, F_OUT)
    assert jnp.allclose(mu, mu_ref, rtol=3e-2, atol=3e-2)
    assert jnp.allclose(logstd, logstd_ref, rtol=3e-2, atol=3e-2)

    print("KERNEL_OK")
</pallas_src>

<mosaic_0001>
module attributes {stable_mosaic.version = 11 : i64} {
  func.func @_gcn_aggregate_kernel(%arg0: i32, %arg1: i32, %arg2: memref<128x128xbf16, #tpu.memory_space<vmem>>, %arg3: memref<128x512xbf16, #tpu.memory_space<vmem>>, %arg4: memref<1x512xf32, #tpu.memory_space<vmem>>, %arg5: memref<128x512xf32, #tpu.memory_space<vmem>>, %arg6: memref<128x512xf32, #tpu.memory_space<vmem>>) attributes {dimension_semantics = [#tpu.dimension_semantics<parallel>, #tpu.dimension_semantics<arbitrary>], iteration_bounds = array<i64: 1, 1>, scalar_prefetch = 0 : i64, scratch_operands = 1 : i64, tpu.core_type = #tpu.core_type<tc>, window_params = [{transform_indices = @transform_0, window_bounds = array<i64: 128, 128>}, {transform_indices = @transform_1, window_bounds = array<i64: 128, 512>}, {pipeline_mode = #tpu.pipeline_mode<synchronous>, transform_indices = @transform_2, window_bounds = array<i64: 1, 512>}, {transform_indices = @transform_3, window_bounds = array<i64: 128, 512>}]} {
    %c0_i32 = arith.constant 0 : i32
    %0 = arith.cmpi eq, %arg1, %c0_i32 : i32
    %1 = arith.extui %0 : i1 to i32
    %c0_i32_0 = arith.constant 0 : i32
    %2 = arith.cmpi ne, %1, %c0_i32_0 : i32
    scf.if %2 {
      %cst_10 = arith.constant 0.000000e+00 : f32
      %12 = vector.broadcast %cst_10 : f32 to vector<128x512xf32>
      %c0_11 = arith.constant 0 : index
      %c0_12 = arith.constant 0 : index
      %13 = vector.load %arg6[%c0_11, %c0_12] : memref<128x512xf32, #tpu.memory_space<vmem>>, vector<128x512xf32>
      tpu.vector_store %arg6[%c0_11, %c0_12], %12 {strides = array<i32>} : memref<128x512xf32, #tpu.memory_space<vmem>>, vector<128x512xf32>,
    } else {
    }
    %c0 = arith.constant 0 : index
    %c0_1 = arith.constant 0 : index
    %3 = vector.load %arg6[%c0, %c0_1] : memref<128x512xf32, #tpu.memory_space<vmem>>, vector<128x512xf32>
    %c0_2 = arith.constant 0 : index
    %c0_3 = arith.constant 0 : index
    %4 = vector.load %arg2[%c0_2, %c0_3] : memref<128x128xbf16, #tpu.memory_space<vmem>>, vector<128x128xbf16>
    %c0_4 = arith.constant 0 : index
    %c0_5 = arith.constant 0 : index
    %5 = vector.load %arg3[%c0_4, %c0_5] : memref<128x512xbf16, #tpu.memory_space<vmem>>, vector<128x512xbf16>
    %cst = arith.constant dense<0.000000e+00> : vector<128x512xf32>
    %6 = tpu.matmul %4, %5, %cst {dimension_numbers = #tpu.dot_dimension_numbers<[1], [0], [0], [1], [0, 0, 1, 1], [], []>} : vector<128x128xbf16>, vector<128x512xbf16>, vector<128x512xf32> -> vector<128x512xf32>
    %7 = arith.addf %3, %6 : vector<128x512xf32>
    %c0_6 = arith.constant 0 : index
    %c0_7 = arith.constant 0 : index
    %8 = vector.load %arg6[%c0_6, %c0_7] : memref<128x512xf32, #tpu.memory_space<vmem>>, vector<128x512xf32>
    tpu.vector_store %arg6[%c0_6, %c0_7], %7 {strides = array<i32>} : memref<128x512xf32, #tpu.memory_space<vmem>>, vector<128x512xf32>,
    %c0_i32_8 = arith.constant 0 : i32
    %9 = arith.cmpi eq, %arg1, %c0_i32_8 : i32
    %10 = arith.extui %9 : i1 to i32
    %c0_i32_9 = arith.constant 0 : i32
    %11 = arith.cmpi ne, %10, %c0_i32_9 : i32
    scf.if %11 {
      %c0_10 = arith.constant 0 : index
      %c0_11 = arith.constant 0 : index
      %12 = vector.load %arg6[%c0_10, %c0_11] : memref<128x512xf32, #tpu.memory_space<vmem>>, vector<128x512xf32>
      %c0_12 = arith.constant 0 : index
      %c0_13 = arith.constant 0 : index
      %13 = vector.load %arg4[%c0_12, %c0_13] : memref<1x512xf32, #tpu.memory_space<vmem>>, vector<1x512xf32>
      %14 = vector.broadcast %13 : vector<1x512xf32> to vector<128x512xf32>
      %15 = arith.addf %12, %14 : vector<128x512xf32>
      %c0_14 = arith.constant 0 : index
      %c0_15 = arith.constant 0 : index
      %16 = vector.load %arg5[%c0_14, %c0_15] : memref<128x512xf32, #tpu.memory_space<vmem>>, vector<128x512xf32>
      tpu.vector_store %arg5[%c0_14, %c0_15], %15 {strides = array<i32>} : memref<128x512xf32, #tpu.memory_space<vmem>>, vector<128x512xf32>,
    } else {
    }
    return
  }
  func.func @transform_0(%arg0: i32, %arg1: i32) -> (i32, i32) {
    %c0_i32 = arith.constant 0 : i32
    return %arg0, %arg1 : i32, i32
  }
  func.func @transform_1(%arg0: i32, %arg1: i32) -> (i32, i32) {
    %c0_i32 = arith.constant 0 : i32
    %c0_i32_0 = arith.constant 0 : i32
    return %arg1, %c0_i32 : i32, i32
  }
  func.func @transform_2(%arg0: i32, %arg1: i32) -> (i32, i32) {
    %c0_i32 = arith.constant 0 : i32
    %c0_i32_0 = arith.constant 0 : i32
    %c0_i32_1 = arith.constant 0 : i32
    return %c0_i32, %c0_i32_0 : i32, i32
  }
  func.func @transform_3(%arg0: i32, %arg1: i32) -> (i32, i32) {
    %c0_i32 = arith.constant 0 : i32
    %c0_i32_0 = arith.constant 0 : i32
    return %arg0, %c0_i32 : i32, i32
  }
}

</mosaic_0001>

<llo_original>
// kernel: tpu_custom_call.1
$region0: #{tpu_custom_call.1}
  #allocation0 [shape = 'u32[]', space=smem, size = 0x4, offset = 0x4, fixed_abs, tag = 'smem constant byte address 0x4 - core index']
  #allocation1 [shape = 'u32[144,128]{1,0:T(1,128)}', space=vmem, size = 0x12000, scoped, tag = 'internal scratch']
  #allocation2 [shape = 'f32[128,512]{1,0:T(8,128)}', space=vmem, size = 0x40000, scoped, tag = 'scratch operand']
  %s0 = inlined_call_operand.hbm [shape: bf16[128,128], index: 0, kind: input, shape index: {}]
  %s1 = inlined_call_operand.hbm [shape: bf16[128,512], index: 1, kind: input, shape index: {}]
  %s2 = inlined_call_operand.vmem [shape: f32[1,512], index: 2, kind: input, shape index: {}]
  %s3 = inlined_call_operand.hbm [shape: f32[128,512], index: 3, kind: output, shape index: {}]
  %s4 = sld [smem:[#allocation0]]
  $region38: #{tpu_custom_call.1} parent=0
    _
  %s6 = ssub.s32 1, %s4
  %s7 = scalar_select 0, %s6, %s4
  $region1: #{tpu_custom_call.1} parent=0
    #allocation3 [shape = 'u8[32768]{0}', space=vmem, size = 0x8000, scoped, tag = 'input window, operand 0, single buffered']
    #allocation4 [shape = 's32[1]{0}', space=sflag, size = 0x4, scoped, tag = 'scoped memory for tpu_custom_call.1']
    #allocation5 [shape = 's32[1]{0}', space=sflag, size = 0x4, scoped, tag = 'scoped memory for tpu_custom_call.1']
    #allocation6 [shape = 'u8[131072]{0}', space=vmem, size = 0x20000, scoped, tag = 'input window, operand 1, single buffered']
    #allocation7 [shape = 's32[1]{0}', space=sflag, size = 0x4, scoped, tag = 'scoped memory for tpu_custom_call.1']
    #allocation8 [shape = 'u8[262144]{0}', space=vmem, size = 0x40000, scoped, tag = 'output window, operand 0, single buffered']
    %8 = vsyncpa [#allocation4], 0
    %9 = vsyncpa [#allocation7], 0
    %10 = vsyncpa [#allocation5], 0
    // Predicated region
    $region2: #{tpu_custom_call.1} parent=1 // pred_check
      _
    $region3: #{tpu_custom_call.1} parent=1 // pred_check_branch
      %12 = sbr.rel (0) target = $region5
    $region4: #{tpu_custom_call.1} parent=1 // pred_region
      %s14 = ssub.s32 1024, 1024
      %15 = vsyncadd [#allocation4], %s14
      %s16 = sshll.u32 [#allocation3], 4
      %s17 = int_to_ptr.vmem [resolvable:$true] %s16
      %22 = dma.hbm_to_vmem [thread:$0]  %s0, 1024, %s17, [#allocation4], 64, 64, 4
    $region5: #{tpu_custom_call.1} parent=1 // pred_fallthru
      _
    // Predicated region
    $region6: #{tpu_custom_call.1} parent=1 // pred_check
      _
    $region7: #{tpu_custom_call.1} parent=1 // pred_check_branch
      %24 = sbr.rel (0) target = $region9
    $region8: #{tpu_custom_call.1} parent=1 // pred_region
      %s26 = ssub.s32 4096, 4096
      %27 = vsyncadd [#allocation7], %s26
      %s28 = sshll.u32 [#allocation6], 4
      %s29 = int_to_ptr.vmem [resolvable:$true] %s28
      %34 = dma.hbm_to_vmem [thread:$0]  %s1, 4096, %s29, [#allocation7], 256, 256, 16
    $region9: #{tpu_custom_call.1} parent=1 // pred_fallthru
      _
    // Predicated region
    $region10: #{tpu_custom_call.1} parent=1 // pred_check
      _
    $region11: #{tpu_custom_call.1} parent=1 // pred_check_branch
      %36 = sbr.rel (0) target = $region13
    $region12: #{tpu_custom_call.1} parent=1 // pred_region
      _
    $region13: #{tpu_custom_call.1} parent=1 // pred_fallthru
      _
    // Predicated region
    $region14: #{tpu_custom_call.1} parent=1 // pred_check
      _
    $region15: #{tpu_custom_call.1} parent=1 // pred_check_branch
      %38 = sbr.rel (0) target = $region17
    $region16: #{tpu_custom_call.1} parent=1 // pred_region
      %39 = dma.done [#allocation4], 1024
    $region17: #{tpu_custom_call.1} parent=1 // pred_fallthru
      _
    // Predicated region
    $region18: #{tpu_custom_call.1} parent=1 // pred_check
      _
    $region19: #{tpu_custom_call.1} parent=1 // pred_check_branch
      %41 = sbr.rel (0) target = $region21
    $region20: #{tpu_custom_call.1} parent=1 // pred_region
      %42 = dma.done [#allocation7], 4096
    $region21: #{tpu_custom_call.1} parent=1 // pred_fallthru
      _
    %p44 = scmp.eq.s32.totalorder 0, 0
    // Predicated region
    $region22: #{tpu_custom_call.1} parent=1 // pred_check
      %p45 = pneg %p44
    $region23: #{tpu_custom_call.1} parent=1 // pred_check_branch
      %47 = sbr.rel (%p45) target = $region25
    $region24: #{tpu_custom_call.1} parent=1 // pred_region
      %48 = vst [vmem:[#allocation2] sm:$0xff] 0.0
      %49 = vst [vmem:[#allocation2 + $0x8] sm:$0xff] 0.0
      %50 = vst [vmem:[#allocation2 + $0x10] sm:$0xff] 0.0
      %51 = vst [vmem:[#allocation2 + $0x18] sm:$0xff] 0.0
      %52 = vst [vmem:[#allocation2 + $0x20] sm:$0xff] 0.0
      %53 = vst [vmem:[#allocation2 + $0x28] sm:$0xff] 0.0
      %54 = vst [vmem:[#allocation2 + $0x30] sm:$0xff] 0.0
      %55 = vst [vmem:[#allocation2 + $0x38] sm:$0xff] 0.0
      %56 = vst [vmem:[#allocation2 + $0x40] sm:$0xff] 0.0
      %57 = vst [vmem:[#allocation2 + $0x48] sm:$0xff] 0.0
      %58 = vst [vmem:[#allocation2 + $0x50] sm:$0xff] 0.0
      %59 = vst [vmem:[#allocation2 + $0x58] sm:$0xff] 0.0
      %60 = vst [vmem:[#allocation2 + $0x60] sm:$0xff] 0.0
      %61 = vst [vmem:[#allocation2 + $0x68] sm:$0xff] 0.0
      %62 = vst [vmem:[#allocation2 + $0x70] sm:$0xff] 0.0
      %63 = vst [vmem:[#allocation2 + $0x78] sm:$0xff] 0.0
      %64 = vst [vmem:[#allocation2 + $0x80] sm:$0xff] 0.0
      %65 = vst [vmem:[#allocation2 + $0x88] sm:$0xff] 0.0
      %66 = vst [vmem:[#allocation2 + $0x90] sm:$0xff] 0.0
      %67 = vst [vmem:[#allocation2 + $0x98] sm:$0xff] 0.0
      %68 = vst [vmem:[#allocation2 + $0xa0] sm:$0xff] 0.0
      %69 = vst [vmem:[#allocation2 + $0xa8] sm:$0xff] 0.0
      %70 = vst [vmem:[#allocation2 + $0xb0] sm:$0xff] 0.0
      %71 = vst [vmem:[#allocation2 + $0xb8] sm:$0xff] 0.0
      %72 = vst [vmem:[#allocation2 + $0xc0] sm:$0xff] 0.0
      %73 = vst [vmem:[#allocation2 + $0xc8] sm:$0xff] 0.0
      %74 = vst [vmem:[#allocation2 + $0xd0] sm:$0xff] 0.0
      %75 = vst [vmem:[#allocation2 + $0xd8] sm:$0xff] 0.0
      %76 = vst [vmem:[#allocation2 + $0xe0] sm:$0xff] 0.0
      %77 = vst [vmem:[#allocation2 + $0xe8] sm:$0xff] 0.0
      %78 = vst [vmem:[#allocation2 + $0xf0] sm:$0xff] 0.0
      %79 = vst [vmem:[#allocation2 + $0xf8] sm:$0xff] 0.0
      %80 = vst [vmem:[#allocation2 + $0x100] sm:$0xff] 0.0
      %81 = vst [vmem:[#allocation2 + $0x108] sm:$0xff] 0.0
      %82 = vst [vmem:[#allocation2 + $0x110] sm:$0xff] 0.0
      %83 = vst [vmem:[#allocation2 + $0x118] sm:$0xff] 0.0
      %84 = vst [vmem:[#allocation2 + $0x120] sm:$0xff] 0.0
      %85 = vst [vmem:[#allocation2 + $0x128] sm:$0xff] 0.0
      %86 = vst [vmem:[#allocation2 + $0x130] sm:$0xff] 0.0
      %87 = vst [vmem:[#allocation2 + $0x138] sm:$0xff] 0.0
      %88 = vst [vmem:[#allocation2 + $0x140] sm:$0xff] 0.0
      %89 = vst [vmem:[#allocation2 + $0x148] sm:$0xff] 0.0
      %90 = vst [vmem:[#allocation2 + $0x150] sm:$0xff] 0.0
      %91 = vst [vmem:[#allocation2 + $0x158] sm:$0xff] 0.0
      %92 = vst [vmem:[#allocation2 + $0x160] sm:$0xff] 0.0
      %93 = vst [vmem:[#allocation2 + $0x168] sm:$0xff] 0.0
      %94 = vst [vmem:[#allocation2 + $0x170] sm:$0xff] 0.0
      %95 = vst [vmem:[#allocation2 + $0x178] sm:$0xff] 0.0
      %96 = vst [vmem:[#allocation2 + $0x180] sm:$0xff] 0.0
      %97 = vst [vmem:[#allocation2 + $0x188] sm:$0xff] 0.0
      %98 = vst [vmem:[#allocation2 + $0x190] sm:$0xff] 0.0
      %99 = vst [vmem:[#allocation2 + $0x198] sm:$0xff] 0.0
      %100 = vst [vmem:[#allocation2 + $0x1a0] sm:$0xff] 0.0
      %101 = vst [vmem:[#allocation2 + $0x1a8] sm:$0xff] 0.0
      %102 = vst [vmem:[#allocation2 + $0x1b0] sm:$0xff] 0.0
      %103 = vst [vmem:[#allocation2 + $0x1b8] sm:$0xff] 0.0
      %104 = vst [vmem:[#allocation2 + $0x1c0] sm:$0xff] 0.0
      %105 = vst [vmem:[#allocation2 + $0x1c8] sm:$0xff] 0.0
      %106 = vst [vmem:[#allocation2 + $0x1d0] sm:$0xff] 0.0
      %107 = vst [vmem:[#allocation2 + $0x1d8] sm:$0xff] 0.0
      %108 = vst [vmem:[#allocation2 + $0x1e0] sm:$0xff] 0.0
      %109 = vst [vmem:[#allocation2 + $0x1e8] sm:$0xff] 0.0
      %110 = vst [vmem:[#allocation2 + $0x1f0] sm:$0xff] 0.0
      %111 = vst [vmem:[#allocation2 + $0x1f8] sm:$0xff] 0.0
    $region25: #{tpu_custom_call.1} parent=1 // pred_fallthru
      _
    %v112 = vld [vmem:[#allocation2] sm:$0xff]
    %v113 = vld [vmem:[#allocation2 + $0x8] sm:$0xff]
    %v114 = vld [vmem:[#allocation2 + $0x10] sm:$0xff]
    %v115 = vld [vmem:[#allocation2 + $0x18] sm:$0xff]
    %v116 = vld [vmem:[#allocation2 + $0x20] sm:$0xff]
    %v117 = vld [vmem:[#allocation2 + $0x28] sm:$0xff]
    %v118 = vld [vmem:[#allocation2 + $0x30] sm:$0xff]
    %v119 = vld [vmem:[#allocation2 + $0x38] sm:$0xff]
    %v120 = vld [vmem:[#allocation2 + $0x40] sm:$0xff]
    %v121 = vld [vmem:[#allocation2 + $0x48] sm:$0xff]
    %v122 = vld [vmem:[#allocation2 + $0x50] sm:$0xff]
    %v123 = vld [vmem:[#allocation2 + $0x58] sm:$0xff]
    %v124 = vld [vmem:[#allocation2 + $0x60] sm:$0xff]
    %v125 = vld [vmem:[#allocation2 + $0x68] sm:$0xff]
    %v126 = vld [vmem:[#allocation2 + $0x70] sm:$0xff]
    %v127 = vld [vmem:[#allocation2 + $0x78] sm:$0xff]
    %v128 = vld [vmem:[#allocation2 + $0x80] sm:$0xff]
    %v129 = vld [vmem:[#allocation2 + $0x88] sm:$0xff]
    %v130 = vld [vmem:[#allocation2 + $0x90] sm:$0xff]
    %v131 = vld [vmem:[#allocation2 + $0x98] sm:$0xff]
    %v132 = vld [vmem:[#allocation2 + $0xa0] sm:$0xff]
    %v133 = vld [vmem:[#allocation2 + $0xa8] sm:$0xff]
    %v134 = vld [vmem:[#allocation2 + $0xb0] sm:$0xff]
    %v135 = vld [vmem:[#allocation2 + $0xb8] sm:$0xff]
    %v136 = vld [vmem:[#allocation2 + $0xc0] sm:$0xff]
    %v137 = vld [vmem:[#allocation2 + $0xc8] sm:$0xff]
    %v138 = vld [vmem:[#allocation2 + $0xd0] sm:$0xff]
    %v139 = vld [vmem:[#allocation2 + $0xd8] sm:$0xff]
    %v140 = vld [vmem:[#allocation2 + $0xe0] sm:$0xff]
    %v141 = vld [vmem:[#allocation2 + $0xe8] sm:$0xff]
    %v142 = vld [vmem:[#allocation2 + $0xf0] sm:$0xff]
    %v143 = vld [vmem:[#allocation2 + $0xf8] sm:$0xff]
    %v144 = vld [vmem:[#allocation2 + $0x100] sm:$0xff]
    %v145 = vld [vmem:[#allocation2 + $0x108] sm:$0xff]
    %v146 = vld [vmem:[#allocation2 + $0x110] sm:$0xff]
    %v147 = vld [vmem:[#allocation2 + $0x118] sm:$0xff]
    %v148 = vld [vmem:[#allocation2 + $0x120] sm:$0xff]
    %v149 = vld [vmem:[#allocation2 + $0x128] sm:$0xff]
    %v150 = vld [vmem:[#allocation2 + $0x130] sm:$0xff]
    %v151 = vld [vmem:[#allocation2 + $0x138] sm:$0xff]
    %v152 = vld [vmem:[#allocation2 + $0x140] sm:$0xff]
    %v153 = vld [vmem:[#allocation2 + $0x148] sm:$0xff]
    %v154 = vld [vmem:[#allocation2 + $0x150] sm:$0xff]
    %v155 = vld [vmem:[#allocation2 + $0x158] sm:$0xff]
    %v156 = vld [vmem:[#allocation2 + $0x160] sm:$0xff]
    %v157 = vld [vmem:[#allocation2 + $0x168] sm:$0xff]
    %v158 = vld [vmem:[#allocation2 + $0x170] sm:$0xff]
    %v159 = vld [vmem:[#allocation2 + $0x178] sm:$0xff]
    %v160 = vld [vmem:[#allocation2 + $0x180] sm:$0xff]
    %v161 = vld [vmem:[#allocation2 + $0x188] sm:$0xff]
    %v162 = vld [vmem:[#allocation2 + $0x190] sm:$0xff]
    %v163 = vld [vmem:[#allocation2 + $0x198] sm:$0xff]
    %v164 = vld [vmem:[#allocation2 + $0x1a0] sm:$0xff]
    %v165 = vld [vmem:[#allocation2 + $0x1a8] sm:$0xff]
    %v166 = vld [vmem:[#allocation2 + $0x1b0] sm:$0xff]
    %v167 = vld [vmem:[#allocation2 + $0x1b8] sm:$0xff]
    %v168 = vld [vmem:[#allocation2 + $0x1c0] sm:$0xff]
    %v169 = vld [vmem:[#allocation2 + $0x1c8] sm:$0xff]
    %v170 = vld [vmem:[#allocation2 + $0x1d0] sm:$0xff]
    %v171 = vld [vmem:[#allocation2 + $0x1d8] sm:$0xff]
    %v172 = vld [vmem:[#allocation2 + $0x1e0] sm:$0xff]
    %v173 = vld [vmem:[#allocation2 + $0x1e8] sm:$0xff]
    %v174 = vld [vmem:[#allocation2 + $0x1f0] sm:$0xff]
    %v175 = vld [vmem:[#allocation2 + $0x1f8] sm:$0xff]
    %v176 = vld [vmem:[#allocation3] sm:$0xf]
    %v177 = vld [vmem:[#allocation3 + $0x4] sm:$0xf]
    %v178 = vld [vmem:[#allocation3 + $0x8] sm:$0xf]
    %v179 = vld [vmem:[#allocation3 + $0xc] sm:$0xf]
    %v180 = vld [vmem:[#allocation3 + $0x10] sm:$0xf]
    %v181 = vld [vmem:[#allocation3 + $0x14] sm:$0xf]
    %v182 = vld [vmem:[#allocation3 + $0x18] sm:$0xf]
    %v183 = vld [vmem:[#allocation3 + $0x1c] sm:$0xf]
    %v184 = vld [vmem:[#allocation3 + $0x20] sm:$0xf]
    %v185 = vld [vmem:[#allocation3 + $0x24] sm:$0xf]
    %v186 = vld [vmem:[#allocation3 + $0x28] sm:$0xf]
    %v187 = vld [vmem:[#allocation3 + $0x2c] sm:$0xf]
    %v188 = vld [vmem:[#allocation3 + $0x30] sm:$0xf]
    %v189 = vld [vmem:[#allocation3 + $0x34] sm:$0xf]
    %v190 = vld [vmem:[#allocation3 + $0x38] sm:$0xf]
    %v191 = vld [vmem:[#allocation3 + $0x3c] sm:$0xf]
    %v192 = vld [vmem:[#allocation6] sm:$0xff]
    %v193 = vld [vmem:[#allocation6 + $0x8] sm:$0xff]
    %v194 = vld [vmem:[#allocation6 + $0x10] sm:$0xff]
    %v195 = vld [vmem:[#allocation6 + $0x18] sm:$0xff]
    %v196 = vld [vmem:[#allocation6 + $0x20] sm:$0xff]
    %v197 = vld [vmem:[#allocation6 + $0x28] sm:$0xff]
    %v198 = vld [vmem:[#allocation6 + $0x30] sm:$0xff]
    %v199 = vld [vmem:[#allocation6 + $0x38] sm:$0xff]
    %v200 = vld [vmem:[#allocation6 + $0x40] sm:$0xff]
    %v201 = vld [vmem:[#allocation6 + $0x48] sm:$0xff]
    %v202 = vld [vmem:[#allocation6 + $0x50] sm:$0xff]
    %v203 = vld [vmem:[#allocation6 + $0x58] sm:$0xff]
    %v204 = vld [vmem:[#allocation6 + $0x60] sm:$0xff]
    %v205 = vld [vmem:[#allocation6 + $0x68] sm:$0xff]
    %v206 = vld [vmem:[#allocation6 + $0x70] sm:$0xff]
    %v207 = vld [vmem:[#allocation6 + $0x78] sm:$0xff]
    %v208 = vld [vmem:[#allocation6 + $0x80] sm:$0xff]
    %v209 = vld [vmem:[#allocation6 + $0x88] sm:$0xff]
    %v210 = vld [vmem:[#allocation6 + $0x90] sm:$0xff]
    %v211 = vld [vmem:[#allocation6 + $0x98] sm:$0xff]
    %v212 = vld [vmem:[#allocation6 + $0xa0] sm:$0xff]
    %v213 = vld [vmem:[#allocation6 + $0xa8] sm:$0xff]
    %v214 = vld [vmem:[#allocation6 + $0xb0] sm:$0xff]
    %v215 = vld [vmem:[#allocation6 + $0xb8] sm:$0xff]
    %v216 = vld [vmem:[#allocation6 + $0xc0] sm:$0xff]
    %v217 = vld [vmem:[#allocation6 + $0xc8] sm:$0xff]
    %v218 = vld [vmem:[#allocation6 + $0xd0] sm:$0xff]
    %v219 = vld [vmem:[#allocation6 + $0xd8] sm:$0xff]
    %v220 = vld [vmem:[#allocation6 + $0xe0] sm:$0xff]
    %v221 = vld [vmem:[#allocation6 + $0xe8] sm:$0xff]
    %v222 = vld [vmem:[#allocation6 + $0xf0] sm:$0xff]
    %v223 = vld [vmem:[#allocation6 + $0xf8] sm:$0xff]
    %v240 = vunpack.c.l.b16 %v176
    %v241 = vunpack.c.l.b16 %v177
    %v242 = vunpack.c.l.b16 %v178
    %v243 = vunpack.c.l.b16 %v179
    %v244 = vunpack.c.l.b16 %v180
    %v245 = vunpack.c.l.b16 %v181
    %v246 = vunpack.c.l.b16 %v182
    %v247 = vunpack.c.l.b16 %v183
    %v248 = vunpack.c.l.b16 %v184
    %v249 = vunpack.c.l.b16 %v185
    %v250 = vunpack.c.l.b16 %v186
    %v251 = vunpack.c.l.b16 %v187
    %v252 = vunpack.c.l.b16 %v188
    %v253 = vunpack.c.l.b16 %v189
    %v254 = vunpack.c.l.b16 %v190
    %v255 = vunpack.c.l.b16 %v191
    %v256 = vpack.c.b16 %v241, %v240
    %v257 = vpack.c.b16 %v243, %v242
    %v258 = vpack.c.b16 %v245, %v244
    %v259 = vpack.c.b16 %v247, %v246
    %v260 = vpack.c.b16 %v249, %v248
    %v261 = vpack.c.b16 %v251, %v250
    %v262 = vpack.c.b16 %v253, %v252
    %v263 = vpack.c.b16 %v255, %v254
    %v304 = vunpack.c.l.b16 %v192
    %v305 = vunpack.c.h.b16 %v192
    %v306 = vunpack.c.l.b16 %v193
    %v307 = vunpack.c.h.b16 %v193
    %v308 = vunpack.c.l.b16 %v194
    %v309 = vunpack.c.h.b16 %v194
    %v310 = vunpack.c.l.b16 %v195
    %v311 = vunpack.c.h.b16 %v195
    %v312 = vunpack.c.l.b16 %v196
    %v313 = vunpack.c.h.b16 %v196
    %v314 = vunpack.c.l.b16 %v197
    %v315 = vunpack.c.h.b16 %v197
    %v316 = vunpack.c.l.b16 %v198
    %v317 = vunpack.c.h.b16 %v198
    %v318 = vunpack.c.l.b16 %v199
    %v319 = vunpack.c.h.b16 %v199
    %v320 = vunpack.c.l.b16 %v200
    %v321 = vunpack.c.h.b16 %v200
    %v322 = vunpack.c.l.b16 %v201
    %v323 = vunpack.c.h.b16 %v201
    %v324 = vunpack.c.l.b16 %v202
    %v325 = vunpack.c.h.b16 %v202
    %v326 = vunpack.c.l.b16 %v203
    %v327 = vunpack.c.h.b16 %v203
    %v328 = vunpack.c.l.b16 %v204
    %v329 = vunpack.c.h.b16 %v204
    %v330 = vunpack.c.l.b16 %v205
    %v331 = vunpack.c.h.b16 %v205
    %v332 = vunpack.c.l.b16 %v206
    %v333 = vunpack.c.h.b16 %v206
    %v334 = vunpack.c.l.b16 %v207
    %v335 = vunpack.c.h.b16 %v207
    %v336 = vunpack.c.l.b16 %v208
    %v337 = vunpack.c.h.b16 %v208
    %v338 = vunpack.c.l.b16 %v209
    %v339 = vunpack.c.h.b16 %v209
    %v340 = vunpack.c.l.b16 %v210
    %v341 = vunpack.c.h.b16 %v210
    %v342 = vunpack.c.l.b16 %v211
    %v343 = vunpack.c.h.b16 %v211
    %v344 = vunpack.c.l.b16 %v212
    %v345 = vunpack.c.h.b16 %v212
    %v346 = vunpack.c.l.b16 %v213
    %v347 = vunpack.c.h.b16 %v213
    %v348 = vunpack.c.l.b16 %v214
    %v349 = vunpack.c.h.b16 %v214
    %v350 = vunpack.c.l.b16 %v215
    %v351 = vunpack.c.h.b16 %v215
    %v352 = vunpack.c.l.b16 %v216
    %v353 = vunpack.c.h.b16 %v216
    %v354 = vunpack.c.l.b16 %v217
    %v355 = vunpack.c.h.b16 %v217
    %v356 = vunpack.c.l.b16 %v218
    %v357 = vunpack.c.h.b16 %v218
    %v358 = vunpack.c.l.b16 %v219
    %v359 = vunpack.c.h.b16 %v219
    %v360 = vunpack.c.l.b16 %v220
    %v361 = vunpack.c.h.b16 %v220
    %v362 = vunpack.c.l.b16 %v221
    %v363 = vunpack.c.h.b16 %v221
    %v364 = vunpack.c.l.b16 %v222
    %v365 = vunpack.c.h.b16 %v222
    %v366 = vunpack.c.l.b16 %v223
    %v367 = vunpack.c.h.b16 %v223
    %v368 = vpack.c.b16 %v308, %v304
    %v369 = vpack.c.b16 %v309, %v305
    %v370 = vpack.c.b16 %v310, %v306
    %v371 = vpack.c.b16 %v311, %v307
    %v372 = vpack.c.b16 %v316, %v312
    %v373 = vpack.c.b16 %v317, %v313
    %v374 = vpack.c.b16 %v318, %v314
    %v375 = vpack.c.b16 %v319, %v315
    %v376 = vpack.c.b16 %v324, %v320
    %v377 = vpack.c.b16 %v325, %v321
    %v378 = vpack.c.b16 %v326, %v322
    %v379 = vpack.c.b16 %v327, %v323
    %v380 = vpack.c.b16 %v332, %v328
    %v381 = vpack.c.b16 %v333, %v329
    %v382 = vpack.c.b16 %v334, %v330
    %v383 = vpack.c.b16 %v335, %v331
    %v384 = vpack.c.b16 %v340, %v336
    %v385 = vpack.c.b16 %v341, %v337
    %v386 = vpack.c.b16 %v342, %v338
    %v387 = vpack.c.b16 %v343, %v339
    %v388 = vpack.c.b16 %v348, %v344
    %v389 = vpack.c.b16 %v349, %v345
    %v390 = vpack.c.b16 %v350, %v346
    %v391 = vpack.c.b16 %v351, %v347
    %v392 = vpack.c.b16 %v356, %v352
    %v393 = vpack.c.b16 %v357, %v353
    %v394 = vpack.c.b16 %v358, %v354
    %v395 = vpack.c.b16 %v359, %v355
    %v396 = vpack.c.b16 %v364, %v360
    %v397 = vpack.c.b16 %v365, %v361
    %v398 = vpack.c.b16 %v366, %v362
    %v399 = vpack.c.b16 %v367, %v363
    %432 = vmatprep.subr.bf16.mxu0 %v369
    %433 = vmatpush1.bf16.msra.mxu0 %v368
    %434 = vmatprep.subr.bf16.mxu0 %v373
    %435 = vmatpush1.bf16.msra.mxu0 %v372
    %436 = vmatprep.subr.bf16.mxu0 %v377
    %437 = vmatpush1.bf16.msra.mxu0 %v376
    %438 = vmatprep.subr.bf16.mxu0 %v381
    %439 = vmatpush1.bf16.msra.mxu0 %v380
    %440 = vmatprep.subr.bf16.mxu0 %v385
    %441 = vmatpush1.bf16.msra.mxu0 %v384
    %442 = vmatprep.subr.bf16.mxu0 %v389
    %443 = vmatpush1.bf16.msra.mxu0 %v388
    %444 = vmatprep.subr.bf16.mxu0 %v393
    %445 = vmatpush1.bf16.msra.mxu0 %v392
    %446 = vmatprep.subr.bf16.mxu0 %v397
    %447 = vmatpush1.bf16.msra.mxu0 %v396
    %448 = vmatprep.subr.bf16.mxu0 0
    %449 = vmatpush1.bf16.msra.mxu0 0
    %450 = vmatprep.subr.bf16.mxu0 0
    %451 = vmatpush1.bf16.msra.mxu0 0
    %452 = vmatprep.subr.bf16.mxu0 0
    %453 = vmatpush1.bf16.msra.mxu0 0
    %454 = vmatprep.subr.bf16.mxu0 0
    %455 = vmatpush1.bf16.msra.mxu0 0
    %456 = vmatprep.subr.bf16.mxu0 0
    %457 = vmatpush1.bf16.msra.mxu0 0
    %458 = vmatprep.subr.bf16.mxu0 0
    %459 = vmatpush1.bf16.msra.mxu0 0
    %460 = vmatprep.subr.bf16.mxu0 0
    %461 = vmatpush1.bf16.msra.mxu0 0
    %462 = vmatprep.subr.bf16.mxu0 0
    %463 = vmatpush1.bf16.msra.mxu0 0
    %464 = vmatprep.mubr.bf16.mxu0 0
    %465 = vmatmul.mubr.bf16.gmra.mrb[0].mxu0 %v256
    %v466 = vpop.f32.mrb[0].mxu0
    %v467 = vadd.f32 0.0, %v466
    %v468 = vpop.f32.mrb[0].mxu0
    %v469 = vadd.f32 0.0, %v468
    %v470 = vpop.f32.mrb[0].mxu0
    %v471 = vadd.f32 0.0, %v470
    %v472 = vpop.f32.mrb[0].mxu0
    %v473 = vadd.f32 0.0, %v472
    %474 = vmatprep.mubr.bf16.mxu0 0
    %475 = vmatmul.mubr.bf16.gmra.mrb[0].mxu0 %v257
    %v476 = vpop.f32.mrb[0].mxu0
    %v477 = vadd.f32 0.0, %v476
    %v478 = vpop.f32.mrb[0].mxu0
    %v479 = vadd.f32 0.0, %v478
    %v480 = vpop.f32.mrb[0].mxu0
    %v481 = vadd.f32 0.0, %v480
    %v482 = vpop.f32.mrb[0].mxu0
    %v483 = vadd.f32 0.0, %v482
    %484 = vmatprep.mubr.bf16.mxu0 0
    %485 = vmatmul.mubr.bf16.gmra.mrb[0].mxu0 %v258
    %v486 = vpop.f32.mrb[0].mxu0
    %v487 = vadd.f32 0.0, %v486
    %v488 = vpop.f32.mrb[0].mxu0
    %v489 = vadd.f32 0.0, %v488
    %v490 = vpop.f32.mrb[0].mxu0
    %v491 = vadd.f32 0.0, %v490
    %v492 = vpop.f32.mrb[0].mxu0
    %v493 = vadd.f32 0.0, %v492
    %494 = vmatprep.mubr.bf16.mxu0 0
    %495 = vmatmul.mubr.bf16.gmra.mrb[0].mxu0 %v259
    %v496 = vpop.f32.mrb[0].mxu0
    %v497 = vadd.f32 0.0, %v496
    %v498 = vpop.f32.mrb[0].mxu0
    %v499 = vadd.f32 0.0, %v498
    %v500 = vpop.f32.mrb[0].mxu0
    %v501 = vadd.f32 0.0, %v500
    %v502 = vpop.f32.mrb[0].mxu0
    %v503 = vadd.f32 0.0, %v502
    %504 = vmatprep.mubr.bf16.mxu0 0
    %505 = vmatmul.mubr.bf16.gmra.mrb[0].mxu0 %v260
    %v506 = vpop.f32.mrb[0].mxu0
    %v507 = vadd.f32 0.0, %v506
    %v508 = vpop.f32.mrb[0].mxu0
    %v509 = vadd.f32 0.0, %v508
    %v510 = vpop.f32.mrb[0].mxu0
    %v511 = vadd.f32 0.0, %v510
    %v512 = vpop.f32.mrb[0].mxu0
    %v513 = vadd.f32 0.0, %v512
    %514 = vmatprep.mubr.bf16.mxu0 0
    %515 = vmatmul.mubr.bf16.gmra.mrb[0].mxu0 %v261
    %v516 = vpop.f32.mrb[0].mxu0
    %v517 = vadd.f32 0.0, %v516
    %v518 = vpop.f32.mrb[0].mxu0
    %v519 = vadd.f32 0.0, %v518
    %v520 = vpop.f32.mrb[0].mxu0
    %v521 = vadd.f32 0.0, %v520
    %v522 = vpop.f32.mrb[0].mxu0
    %v523 = vadd.f32 0.0, %v522
    %524 = vmatprep.mubr.bf16.mxu0 0
    %525 = vmatmul.mubr.bf16.gmra.mrb[0].mxu0 %v262
    %v526 = vpop.f32.mrb[0].mxu0
    %v527 = vadd.f32 0.0, %v526
    %v528 = vpop.f32.mrb[0].mxu0
    %v529 = vadd.f32 0.0, %v528
    %v530 = vpop.f32.mrb[0].mxu0
    %v531 = vadd.f32 0.0, %v530
    %v532 = vpop.f32.mrb[0].mxu0
    %v533 = vadd.f32 0.0, %v532
    %534 = vmatprep.mubr.bf16.mxu0 0
    %535 = vmatmul.mubr.bf16.gmra.mrb[0].mxu0 %v263
    %v536 = vpop.f32.mrb[0].mxu0
    %v537 = vadd.f32 0.0, %v536
    %v538 = vpop.f32.mrb[0].mxu0
    %v539 = vadd.f32 0.0, %v538
    %v540 = vpop.f32.mrb[0].mxu0
    %v541 = vadd.f32 0.0, %v540
    %v542 = vpop.f32.mrb[0].mxu0
    %v543 = vadd.f32 0.0, %v542
    %544 = vdwg.mxu0
    %545 = vmatprep.subr.bf16.mxu0 %v371
    %546 = vmatpush1.bf16.msra.mxu0 %v370
    %547 = vmatprep.subr.bf16.mxu0 %v375
    %548 = vmatpush1.bf16.msra.mxu0 %v374
    %549 = vmatprep.subr.bf16.mxu0 %v379
    %550 = vmatpush1.bf16.msra.mxu0 %v378
    %551 = vmatprep.subr.bf16.mxu0 %v383
    %552 = vmatpush1.bf16.msra.mxu0 %v382
    %553 = vmatprep.subr.bf16.mxu0 %v387
    %554 = vmatpush1.bf16.msra.mxu0 %v386
    %555 = vmatprep.subr.bf16.mxu0 %v391
    %556 = vmatpush1.bf16.msra.mxu0 %v390
    %557 = vmatprep.subr.bf16.mxu0 %v395
    %558 = vmatpush1.bf16.msra.mxu0 %v394
    %559 = vmatprep.subr.bf16.mxu0 %v399
    %560 = vmatpush1.bf16.msra.mxu0 %v398
    %561 = vmatprep.subr.bf16.mxu0 0
    %562 = vmatpush1.bf16.msra.mxu0 0
    %563 = vmatprep.subr.bf16.mxu0 0
    %564 = vmatpush1.bf16.msra.mxu0 0
    %565 = vmatprep.subr.bf16.mxu0 0
    %566 = vmatpush1.bf16.msra.mxu0 0
    %567 = vmatprep.subr.bf16.mxu0 0
    %568 = vmatpush1.bf16.msra.mxu0 0
    %569 = vmatprep.subr.bf16.mxu0 0
    %570 = vmatpush1.bf16.msra.mxu0 0
    %571 = vmatprep.subr.bf16.mxu0 0
    %572 = vmatpush1.bf16.msra.mxu0 0
    %573 = vmatprep.subr.bf16.mxu0 0
    %574 = vmatpush1.bf16.msra.mxu0 0
    %575 = vmatprep.subr.bf16.mxu0 0
    %576 = vmatpush1.bf16.msra.mxu0 0
    %577 = vmatprep.mubr.bf16.mxu0 0
    %578 = vmatmul.mubr.bf16.gmra.mrb[0].mxu0 %v256
    %v579 = vpop.f32.mrb[0].mxu0
    %v580 = vadd.f32 0.0, %v579
    %v581 = vpop.f32.mrb[0].mxu0
    %v582 = vadd.f32 0.0, %v581
    %v583 = vpop.f32.mrb[0].mxu0
    %v584 = vadd.f32 0.0, %v583
    %v585 = vpop.f32.mrb[0].mxu0
    %v586 = vadd.f32 0.0, %v585
    %587 = vmatprep.mubr.bf16.mxu0 0
    %588 = vmatmul.mubr.bf16.gmra.mrb[0].mxu0 %v257
    %v589 = vpop.f32.mrb[0].mxu0
    %v590 = vadd.f32 0.0, %v589
    %v591 = vpop.f32.mrb[0].mxu0
    %v592 = vadd.f32 0.0, %v591
    %v593 = vpop.f32.mrb[0].mxu0
    %v594 = vadd.f32 0.0, %v593
    %v595 = vpop.f32.mrb[0].mxu0
    %v596 = vadd.f32 0.0, %v595
    %597 = vmatprep.mubr.bf16.mxu0 0
    %598 = vmatmul.mubr.bf16.gmra.mrb[0].mxu0 %v258
    %v599 = vpop.f32.mrb[0].mxu0
    %v600 = vadd.f32 0.0, %v599
    %v601 = vpop.f32.mrb[0].mxu0
    %v602 = vadd.f32 0.0, %v601
    %v603 = vpop.f32.mrb[0].mxu0
    %v604 = vadd.f32 0.0, %v603
    %v605 = vpop.f32.mrb[0].mxu0
    %v606 = vadd.f32 0.0, %v605
    %607 = vmatprep.mubr.bf16.mxu0 0
    %608 = vmatmul.mubr.bf16.gmra.mrb[0].mxu0 %v259
    %v609 = vpop.f32.mrb[0].mxu0
    %v610 = vadd.f32 0.0, %v609
    %v611 = vpop.f32.mrb[0].mxu0
    %v612 = vadd.f32 0.0, %v611
    %v613 = vpop.f32.mrb[0].mxu0
    %v614 = vadd.f32 0.0, %v613
    %v615 = vpop.f32.mrb[0].mxu0
    %v616 = vadd.f32 0.0, %v615
    %617 = vmatprep.mubr.bf16.mxu0 0
    %618 = vmatmul.mubr.bf16.gmra.mrb[0].mxu0 %v260
    %v619 = vpop.f32.mrb[0].mxu0
    %v620 = vadd.f32 0.0, %v619
    %v621 = vpop.f32.mrb[0].mxu0
    %v622 = vadd.f32 0.0, %v621
    %v623 = vpop.f32.mrb[0].mxu0
    %v624 = vadd.f32 0.0, %v623
    %v625 = vpop.f32.mrb[0].mxu0
    %v626 = vadd.f32 0.0, %v625
    %627 = vmatprep.mubr.bf16.mxu0 0
    %628 = vmatmul.mubr.bf16.gmra.mrb[0].mxu0 %v261
    %v629 = vpop.f32.mrb[0].mxu0
    %v630 = vadd.f32 0.0, %v629
    %v631 = vpop.f32.mrb[0].mxu0
    %v632 = vadd.f32 0.0, %v631
    %v633 = vpop.f32.mrb[0].mxu0
    %v634 = vadd.f32 0.0, %v633
    %v635 = vpop.f32.mrb[0].mxu0
    %v636 = vadd.f32 0.0, %v635
    %637 = vmatprep.mubr.bf16.mxu0 0
    %638 = vmatmul.mubr.bf16.gmra.mrb[0].mxu0 %v262
    %v639 = vpop.f32.mrb[0].mxu0
    %v640 = vadd.f32 0.0, %v639
    %v641 = vpop.f32.mrb[0].mxu0
    %v642 = vadd.f32 0.0, %v641
    %v643 = vpop.f32.mrb[0].mxu0
    %v644 = vadd.f32 0.0, %v643
    %v645 = vpop.f32.mrb[0].mxu0
    %v646 = vadd.f32 0.0, %v645
    %647 = vmatprep.mubr.bf16.mxu0 0
    %648 = vmatmul.mubr.bf16.gmra.mrb[0].mxu0 %v263
    %v649 = vpop.f32.mrb[0].mxu0
    %v650 = vadd.f32 0.0, %v649
    %v651 = vpop.f32.mrb[0].mxu0
    %v652 = vadd.f32 0.0, %v651
    %v653 = vpop.f32.mrb[0].mxu0
    %v654 = vadd.f32 0.0, %v653
    %v655 = vpop.f32.mrb[0].mxu0
    %v656 = vadd.f32 0.0, %v655
    %657 = vdwg.mxu0
    %v658 = vadd.f32 %v112, %v467
    %v659 = vadd.f32 %v113, %v469
    %v660 = vadd.f32 %v114, %v580
    %v661 = vadd.f32 %v115, %v582
    %v662 = vadd.f32 %v116, %v471
    %v663 = vadd.f32 %v117, %v473
    %v664 = vadd.f32 %v118, %v584
    %v665 = vadd.f32 %v119, %v586
    %v666 = vadd.f32 %v120, %v477
    %v667 = vadd.f32 %v121, %v479
    %v668 = vadd.f32 %v122, %v590
    %v669 = vadd.f32 %v123, %v592
    %v670 = vadd.f32 %v124, %v481
    %v671 = vadd.f32 %v125, %v483
    %v672 = vadd.f32 %v126, %v594
    %v673 = vadd.f32 %v127, %v596
    %v674 = vadd.f32 %v128, %v487
    %v675 = vadd.f32 %v129, %v489
    %v676 = vadd.f32 %v130, %v600
    %v677 = vadd.f32 %v131, %v602
    %v678 = vadd.f32 %v132, %v491
    %v679 = vadd.f32 %v133, %v493
    %v680 = vadd.f32 %v134, %v604
    %v681 = vadd.f32 %v135, %v606
    %v682 = vadd.f32 %v136, %v497
    %v683 = vadd.f32 %v137, %v499
    %v684 = vadd.f32 %v138, %v610
    %v685 = vadd.f32 %v139, %v612
    %v686 = vadd.f32 %v140, %v501
    %v687 = vadd.f32 %v141, %v503
    %v688 = vadd.f32 %v142, %v614
    %v689 = vadd.f32 %v143, %v616
    %v690 = vadd.f32 %v144, %v507
    %v691 = vadd.f32 %v145, %v509
    %v692 = vadd.f32 %v146, %v620
    %v693 = vadd.f32 %v147, %v622
    %v694 = vadd.f32 %v148, %v511
    %v695 = vadd.f32 %v149, %v513
    %v696 = vadd.f32 %v150, %v624
    %v697 = vadd.f32 %v151, %v626
    %v698 = vadd.f32 %v152, %v517
    %v699 = vadd.f32 %v153, %v519
    %v700 = vadd.f32 %v154, %v630
    %v701 = vadd.f32 %v155, %v632
    %v702 = vadd.f32 %v156, %v521
    %v703 = vadd.f32 %v157, %v523
    %v704 = vadd.f32 %v158, %v634
    %v705 = vadd.f32 %v159, %v636
    %v706 = vadd.f32 %v160, %v527
    %v707 = vadd.f32 %v161, %v529
    %v708 = vadd.f32 %v162, %v640
    %v709 = vadd.f32 %v163, %v642
    %v710 = vadd.f32 %v164, %v531
    %v711 = vadd.f32 %v165, %v533
    %v712 = vadd.f32 %v166, %v644
    %v713 = vadd.f32 %v167, %v646
    %v714 = vadd.f32 %v168, %v537
    %v715 = vadd.f32 %v169, %v539
    %v716 = vadd.f32 %v170, %v650
    %v717 = vadd.f32 %v171, %v652
    %v718 = vadd.f32 %v172, %v541
    %v719 = vadd.f32 %v173, %v543
    %v720 = vadd.f32 %v174, %v654
    %v721 = vadd.f32 %v175, %v656
    %722 = vst [vmem:[#allocation2] sm:$0xff] %v658
    %723 = vst [vmem:[#allocation2 + $0x8] sm:$0xff] %v659
    %724 = vst [vmem:[#allocation2 + $0x10] sm:$0xff] %v660
    %725 = vst [vmem:[#allocation2 + $0x18] sm:$0xff] %v661
    %726 = vst [vmem:[#allocation2 + $0x20] sm:$0xff] %v662
    %727 = vst [vmem:[#allocation2 + $0x28] sm:$0xff] %v663
    %728 = vst [vmem:[#allocation2 + $0x30] sm:$0xff] %v664
    %729 = vst [vmem:[#allocation2 + $0x38] sm:$0xff] %v665
    %730 = vst [vmem:[#allocation2 + $0x40] sm:$0xff] %v666
    %731 = vst [vmem:[#allocation2 + $0x48] sm:$0xff] %v667
    %732 = vst [vmem:[#allocation2 + $0x50] sm:$0xff] %v668
    %733 = vst [vmem:[#allocation2 + $0x58] sm:$0xff] %v669
    %734 = vst [vmem:[#allocation2 + $0x60] sm:$0xff] %v670
    %735 = vst [vmem:[#allocation2 + $0x68] sm:$0xff] %v671
    %736 = vst [vmem:[#allocation2 + $0x70] sm:$0xff] %v672
    %737 = vst [vmem:[#allocation2 + $0x78] sm:$0xff] %v673
    %738 = vst [vmem:[#allocation2 + $0x80] sm:$0xff] %v674
    %739 = vst [vmem:[#allocation2 + $0x88] sm:$0xff] %v675
    %740 = vst [vmem:[#allocation2 + $0x90] sm:$0xff] %v676
    %741 = vst [vmem:[#allocation2 + $0x98] sm:$0xff] %v677
    %742 = vst [vmem:[#allocation2 + $0xa0] sm:$0xff] %v678
    %743 = vst [vmem:[#allocation2 + $0xa8] sm:$0xff] %v679
    %744 = vst [vmem:[#allocation2 + $0xb0] sm:$0xff] %v680
    %745 = vst [vmem:[#allocation2 + $0xb8] sm:$0xff] %v681
    %746 = vst [vmem:[#allocation2 + $0xc0] sm:$0xff] %v682
    %747 = vst [vmem:[#allocation2 + $0xc8] sm:$0xff] %v683
    %748 = vst [vmem:[#allocation2 + $0xd0] sm:$0xff] %v684
    %749 = vst [vmem:[#allocation2 + $0xd8] sm:$0xff] %v685
    %750 = vst [vmem:[#allocation2 + $0xe0] sm:$0xff] %v686
    %751 = vst [vmem:[#allocation2 + $0xe8] sm:$0xff] %v687
    %752 = vst [vmem:[#allocation2 + $0xf0] sm:$0xff] %v688
    %753 = vst [vmem:[#allocation2 + $0xf8] sm:$0xff] %v689
    %754 = vst [vmem:[#allocation2 + $0x100] sm:$0xff] %v690
    %755 = vst [vmem:[#allocation2 + $0x108] sm:$0xff] %v691
    %756 = vst [vmem:[#allocation2 + $0x110] sm:$0xff] %v692
    %757 = vst [vmem:[#allocation2 + $0x118] sm:$0xff] %v693
    %758 = vst [vmem:[#allocation2 + $0x120] sm:$0xff] %v694
    %759 = vst [vmem:[#allocation2 + $0x128] sm:$0xff] %v695
    %760 = vst [vmem:[#allocation2 + $0x130] sm:$0xff] %v696
    %761 = vst [vmem:[#allocation2 + $0x138] sm:$0xff] %v697
    %762 = vst [vmem:[#allocation2 + $0x140] sm:$0xff] %v698
    %763 = vst [vmem:[#allocation2 + $0x148] sm:$0xff] %v699
    %764 = vst [vmem:[#allocation2 + $0x150] sm:$0xff] %v700
    %765 = vst [vmem:[#allocation2 + $0x158] sm:$0xff] %v701
    %766 = vst [vmem:[#allocation2 + $0x160] sm:$0xff] %v702
    %767 = vst [vmem:[#allocation2 + $0x168] sm:$0xff] %v703
    %768 = vst [vmem:[#allocation2 + $0x170] sm:$0xff] %v704
    %769 = vst [vmem:[#allocation2 + $0x178] sm:$0xff] %v705
    %770 = vst [vmem:[#allocation2 + $0x180] sm:$0xff] %v706
    %771 = vst [vmem:[#allocation2 + $0x188] sm:$0xff] %v707
    %772 = vst [vmem:[#allocation2 + $0x190] sm:$0xff] %v708
    %773 = vst [vmem:[#allocation2 + $0x198] sm:$0xff] %v709
    %774 = vst [vmem:[#allocation2 + $0x1a0] sm:$0xff] %v710
    %775 = vst [vmem:[#allocation2 + $0x1a8] sm:$0xff] %v711
    %776 = vst [vmem:[#allocation2 + $0x1b0] sm:$0xff] %v712
    %777 = vst [vmem:[#allocation2 + $0x1b8] sm:$0xff] %v713
    %778 = vst [vmem:[#allocation2 + $0x1c0] sm:$0xff] %v714
    %779 = vst [vmem:[#allocation2 + $0x1c8] sm:$0xff] %v715
    %780 = vst [vmem:[#allocation2 + $0x1d0] sm:$0xff] %v716
    %781 = vst [vmem:[#allocation2 + $0x1d8] sm:$0xff] %v717
    %782 = vst [vmem:[#allocation2 + $0x1e0] sm:$0xff] %v718
    %783 = vst [vmem:[#allocation2 + $0x1e8] sm:$0xff] %v719
    %784 = vst [vmem:[#allocation2 + $0x1f0] sm:$0xff] %v720
    %785 = vst [vmem:[#allocation2 + $0x1f8] sm:$0xff] %v721
    // Predicated region
    $region26: #{tpu_custom_call.1} parent=1 // pred_check
      %p786 = pneg %p44
    $region27: #{tpu_custom_call.1} parent=1 // pred_check_branch
      %788 = sbr.rel (%p786) target = $region29
    $region28: #{tpu_custom_call.1} parent=1 // pred_region
      %v789 = vld [vmem:[#allocation2] sm:$0xff]
      %v790 = vld [vmem:[#allocation2 + $0x8] sm:$0xff]
      %v791 = vld [vmem:[#allocation2 + $0x10] sm:$0xff]
      %v792 = vld [vmem:[#allocation2 + $0x18] sm:$0xff]
      %v793 = vld [vmem:[#allocation2 + $0x20] sm:$0xff]
      %v794 = vld [vmem:[#allocation2 + $0x28] sm:$0xff]
      %v795 = vld [vmem:[#allocation2 + $0x30] sm:$0xff]
      %v796 = vld [vmem:[#allocation2 + $0x38] sm:$0xff]
      %v797 = vld [vmem:[#allocation2 + $0x40] sm:$0xff]
      %v798 = vld [vmem:[#allocation2 + $0x48] sm:$0xff]
      %v799 = vld [vmem:[#allocation2 + $0x50] sm:$0xff]
      %v800 = vld [vmem:[#allocation2 + $0x58] sm:$0xff]
      %v801 = vld [vmem:[#allocation2 + $0x60] sm:$0xff]
      %v802 = vld [vmem:[#allocation2 + $0x68] sm:$0xff]
      %v803 = vld [vmem:[#allocation2 + $0x70] sm:$0xff]
      %v804 = vld [vmem:[#allocation2 + $0x78] sm:$0xff]
      %v805 = vld [vmem:[#allocation2 + $0x80] sm:$0xff]
      %v806 = vld [vmem:[#allocation2 + $0x88] sm:$0xff]
      %v807 = vld [vmem:[#allocation2 + $0x90] sm:$0xff]
      %v808 = vld [vmem:[#allocation2 + $0x98] sm:$0xff]
      %v809 = vld [vmem:[#allocation2 + $0xa0] sm:$0xff]
      %v810 = vld [vmem:[#allocation2 + $0xa8] sm:$0xff]
      %v811 = vld [vmem:[#allocation2 + $0xb0] sm:$0xff]
      %v812 = vld [vmem:[#allocation2 + $0xb8] sm:$0xff]
      %v813 = vld [vmem:[#allocation2 + $0xc0] sm:$0xff]
      %v814 = vld [vmem:[#allocation2 + $0xc8] sm:$0xff]
      %v815 = vld [vmem:[#allocation2 + $0xd0] sm:$0xff]
      %v816 = vld [vmem:[#allocation2 + $0xd8] sm:$0xff]
      %v817 = vld [vmem:[#allocation2 + $0xe0] sm:$0xff]
      %v818 = vld [vmem:[#allocation2 + $0xe8] sm:$0xff]
      %v819 = vld [vmem:[#allocation2 + $0xf0] sm:$0xff]
      %v820 = vld [vmem:[#allocation2 + $0xf8] sm:$0xff]
      %v821 = vld [vmem:[#allocation2 + $0x100] sm:$0xff]
      %v822 = vld [vmem:[#allocation2 + $0x108] sm:$0xff]
      %v823 = vld [vmem:[#allocation2 + $0x110] sm:$0xff]
      %v824 = vld [vmem:[#allocation2 + $0x118] sm:$0xff]
      %v825 = vld [vmem:[#allocation2 + $0x120] sm:$0xff]
      %v826 = vld [vmem:[#allocation2 + $0x128] sm:$0xff]
      %v827 = vld [vmem:[#allocation2 + $0x130] sm:$0xff]
      %v828 = vld [vmem:[#allocation2 + $0x138] sm:$0xff]
      %v829 = vld [vmem:[#allocation2 + $0x140] sm:$0xff]
      %v830 = vld [vmem:[#allocation2 + $0x148] sm:$0xff]
      %v831 = vld [vmem:[#allocation2 + $0x150] sm:$0xff]
      %v832 = vld [vmem:[#allocation2 + $0x158] sm:$0xff]
      %v833 = vld [vmem:[#allocation2 + $0x160] sm:$0xff]
      %v834 = vld [vmem:[#allocation2 + $0x168] sm:$0xff]
      %v835 = vld [vmem:[#allocation2 + $0x170] sm:$0xff]
      %v836 = vld [vmem:[#allocation2 + $0x178] sm:$0xff]
      %v837 = vld [vmem:[#allocation2 + $0x180] sm:$0xff]
      %v838 = vld [vmem:[#allocation2 + $0x188] sm:$0xff]
      %v839 = vld [vmem:[#allocation2 + $0x190] sm:$0xff]
      %v840 = vld [vmem:[#allocation2 + $0x198] sm:$0xff]
      %v841 = vld [vmem:[#allocation2 + $0x1a0] sm:$0xff]
      %v842 = vld [vmem:[#allocation2 + $0x1a8] sm:$0xff]
      %v843 = vld [vmem:[#allocation2 + $0x1b0] sm:$0xff]
      %v844 = vld [vmem:[#allocation2 + $0x1b8] sm:$0xff]
      %v845 = vld [vmem:[#allocation2 + $0x1c0] sm:$0xff]
      %v846 = vld [vmem:[#allocation2 + $0x1c8] sm:$0xff]
      %v847 = vld [vmem:[#allocation2 + $0x1d0] sm:$0xff]
      %v848 = vld [vmem:[#allocation2 + $0x1d8] sm:$0xff]
      %v849 = vld [vmem:[#allocation2 + $0x1e0] sm:$0xff]
      %v850 = vld [vmem:[#allocation2 + $0x1e8] sm:$0xff]
      %v851 = vld [vmem:[#allocation2 + $0x1f0] sm:$0xff]
      %v852 = vld [vmem:[#allocation2 + $0x1f8] sm:$0xff]
      %v853 = vld [vmem:[%s2] sm:$0xf]
      %v855 = vlaneseq
      %v856 = vshrl.u32 %v855, 7
      %v857 = vsub.s32 0, %v856
      %v858 = vrot.slane %v853, %v857
      %v859 = vlaneseq
      %v860 = vshrl.u32 %v859, 7
      %v861 = vsub.s32 1, %v860
      %v862 = vrot.slane %v853, %v861
      %v863 = vlaneseq
      %v864 = vshrl.u32 %v863, 7
      %v865 = vsub.s32 2, %v864
      %v866 = vrot.slane %v853, %v865
      %v867 = vlaneseq
      %v868 = vshrl.u32 %v867, 7
      %v869 = vsub.s32 3, %v868
      %v870 = vrot.slane %v853, %v869
      %v875 = vadd.f32 %v789, %v858
      %v876 = vadd.f32 %v790, %v862
      %v877 = vadd.f32 %v791, %v866
      %v878 = vadd.f32 %v792, %v870
      %v879 = vadd.f32 %v793, %v858
      %v880 = vadd.f32 %v794, %v862
      %v881 = vadd.f32 %v795, %v866
      %v882 = vadd.f32 %v796, %v870
      %v883 = vadd.f32 %v797, %v858
      %v884 = vadd.f32 %v798, %v862
      %v885 = vadd.f32 %v799, %v866
      %v886 = vadd.f32 %v800, %v870
      %v887 = vadd.f32 %v801, %v858
      %v888 = vadd.f32 %v802, %v862
      %v889 = vadd.f32 %v803, %v866
      %v890 = vadd.f32 %v804, %v870
      %v891 = vadd.f32 %v805, %v858
      %v892 = vadd.f32 %v806, %v862
      %v893 = vadd.f32 %v807, %v866
      %v894 = vadd.f32 %v808, %v870
      %v895 = vadd.f32 %v809, %v858
      %v896 = vadd.f32 %v810, %v862
      %v897 = vadd.f32 %v811, %v866
      %v898 = vadd.f32 %v812, %v870
      %v899 = vadd.f32 %v813, %v858
      %v900 = vadd.f32 %v814, %v862
      %v901 = vadd.f32 %v815, %v866
      %v902 = vadd.f32 %v816, %v870
      %v903 = vadd.f32 %v817, %v858
      %v904 = vadd.f32 %v818, %v862
      %v905 = vadd.f32 %v819, %v866
      %v906 = vadd.f32 %v820, %v870
      %v907 = vadd.f32 %v821, %v858
      %v908 = vadd.f32 %v822, %v862
      %v909 = vadd.f32 %v823, %v866
      %v910 = vadd.f32 %v824, %v870
      %v911 = vadd.f32 %v825, %v858
      %v912 = vadd.f32 %v826, %v862
      %v913 = vadd.f32 %v827, %v866
      %v914 = vadd.f32 %v828, %v870
      %v915 = vadd.f32 %v829, %v858
      %v916 = vadd.f32 %v830, %v862
      %v917 = vadd.f32 %v831, %v866
      %v918 = vadd.f32 %v832, %v870
      %v919 = vadd.f32 %v833, %v858
      %v920 = vadd.f32 %v834, %v862
      %v921 = vadd.f32 %v835, %v866
      %v922 = vadd.f32 %v836, %v870
      %v923 = vadd.f32 %v837, %v858
      %v924 = vadd.f32 %v838, %v862
      %v925 = vadd.f32 %v839, %v866
      %v926 = vadd.f32 %v840, %v870
      %v927 = vadd.f32 %v841, %v858
      %v928 = vadd.f32 %v842, %v862
      %v929 = vadd.f32 %v843, %v866
      %v930 = vadd.f32 %v844, %v870
      %v931 = vadd.f32 %v845, %v858
      %v932 = vadd.f32 %v846, %v862
      %v933 = vadd.f32 %v847, %v866
      %v934 = vadd.f32 %v848, %v870
      %v935 = vadd.f32 %v849, %v858
      %v936 = vadd.f32 %v850, %v862
      %v937 = vadd.f32 %v851, %v866
      %v938 = vadd.f32 %v852, %v870
      %939 = vst [vmem:[#allocation8] sm:$0xff] %v875
      %940 = vst [vmem:[#allocation8 + $0x8] sm:$0xff] %v876
      %941 = vst [vmem:[#allocation8 + $0x10] sm:$0xff] %v877
      %942 = vst [vmem:[#allocation8 + $0x18] sm:$0xff] %v878
      %943 = vst [vmem:[#allocation8 + $0x20] sm:$0xff] %v879
      %944 = vst [vmem:[#allocation8 + $0x28] sm:$0xff] %v880
      %945 = vst [vmem:[#allocation8 + $0x30] sm:$0xff] %v881
      %946 = vst [vmem:[#allocation8 + $0x38] sm:$0xff] %v882
      %947 = vst [vmem:[#allocation8 + $0x40] sm:$0xff] %v883
      %948 = vst [vmem:[#allocation8 + $0x48] sm:$0xff] %v884
      %949 = vst [vmem:[#allocation8 + $0x50] sm:$0xff] %v885
      %950 = vst [vmem:[#allocation8 + $0x58] sm:$0xff] %v886
      %951 = vst [vmem:[#allocation8 + $0x60] sm:$0xff] %v887
      %952 = vst [vmem:[#allocation8 + $0x68] sm:$0xff] %v888
      %953 = vst [vmem:[#allocation8 + $0x70] sm:$0xff] %v889
      %954 = vst [vmem:[#allocation8 + $0x78] sm:$0xff] %v890
      %955 = vst [vmem:[#allocation8 + $0x80] sm:$0xff] %v891
      %956 = vst [vmem:[#allocation8 + $0x88] sm:$0xff] %v892
      %957 = vst [vmem:[#allocation8 + $0x90] sm:$0xff] %v893
      %958 = vst [vmem:[#allocation8 + $0x98] sm:$0xff] %v894
      %959 = vst [vmem:[#allocation8 + $0xa0] sm:$0xff] %v895
      %960 = vst [vmem:[#allocation8 + $0xa8] sm:$0xff] %v896
      %961 = vst [vmem:[#allocation8 + $0xb0] sm:$0xff] %v897
      %962 = vst [vmem:[#allocation8 + $0xb8] sm:$0xff] %v898
      %963 = vst [vmem:[#allocation8 + $0xc0] sm:$0xff] %v899
      %964 = vst [vmem:[#allocation8 + $0xc8] sm:$0xff] %v900
      %965 = vst [vmem:[#allocation8 + $0xd0] sm:$0xff] %v901
      %966 = vst [vmem:[#allocation8 + $0xd8] sm:$0xff] %v902
      %967 = vst [vmem:[#allocation8 + $0xe0] sm:$0xff] %v903
      %968 = vst [vmem:[#allocation8 + $0xe8] sm:$0xff] %v904
      %969 = vst [vmem:[#allocation8 + $0xf0] sm:$0xff] %v905
      %970 = vst [vmem:[#allocation8 + $0xf8] sm:$0xff] %v906
      %971 = vst [vmem:[#allocation8 + $0x100] sm:$0xff] %v907
      %972 = vst [vmem:[#allocation8 + $0x108] sm:$0xff] %v908
      %973 = vst [vmem:[#allocation8 + $0x110] sm:$0xff] %v909
      %974 = vst [vmem:[#allocation8 + $0x118] sm:$0xff] %v910
      %975 = vst [vmem:[#allocation8 + $0x120] sm:$0xff] %v911
      %976 = vst [vmem:[#allocation8 + $0x128] sm:$0xff] %v912
      %977 = vst [vmem:[#allocation8 + $0x130] sm:$0xff] %v913
      %978 = vst [vmem:[#allocation8 + $0x138] sm:$0xff] %v914
      %979 = vst [vmem:[#allocation8 + $0x140] sm:$0xff] %v915
      %980 = vst [vmem:[#allocation8 + $0x148] sm:$0xff] %v916
      %981 = vst [vmem:[#allocation8 + $0x150] sm:$0xff] %v917
      %982 = vst [vmem:[#allocation8 + $0x158] sm:$0xff] %v918
      %983 = vst [vmem:[#allocation8 + $0x160] sm:$0xff] %v919
      %984 = vst [vmem:[#allocation8 + $0x168] sm:$0xff] %v920
      %985 = vst [vmem:[#allocation8 + $0x170] sm:$0xff] %v921
      %986 = vst [vmem:[#allocation8 + $0x178] sm:$0xff] %v922
      %987 = vst [vmem:[#allocation8 + $0x180] sm:$0xff] %v923
      %988 = vst [vmem:[#allocation8 + $0x188] sm:$0xff] %v924
      %989 = vst [vmem:[#allocation8 + $0x190] sm:$0xff] %v925
      %990 = vst [vmem:[#allocation8 + $0x198] sm:$0xff] %v926
      %991 = vst [vmem:[#allocation8 + $0x1a0] sm:$0xff] %v927
      %992 = vst [vmem:[#allocation8 + $0x1a8] sm:$0xff] %v928
      %993 = vst [vmem:[#allocation8 + $0x1b0] sm:$0xff] %v929
      %994 = vst [vmem:[#allocation8 + $0x1b8] sm:$0xff] %v930
      %995 = vst [vmem:[#allocation8 + $0x1c0] sm:$0xff] %v931
      %996 = vst [vmem:[#allocation8 + $0x1c8] sm:$0xff] %v932
      %997 = vst [vmem:[#allocation8 + $0x1d0] sm:$0xff] %v933
      %998 = vst [vmem:[#allocation8 + $0x1d8] sm:$0xff] %v934
      %999 = vst [vmem:[#allocation8 + $0x1e0] sm:$0xff] %v935
      %1000 = vst [vmem:[#allocation8 + $0x1e8] sm:$0xff] %v936
      %1001 = vst [vmem:[#allocation8 + $0x1f0] sm:$0xff] %v937
      %1002 = vst [vmem:[#allocation8 + $0x1f8] sm:$0xff] %v938
    $region29: #{tpu_custom_call.1} parent=1 // pred_fallthru
      _
    // Predicated region
    $region30: #{tpu_custom_call.1} parent=1 // pred_check
      _
    $region31: #{tpu_custom_call.1} parent=1 // pred_check_branch
      %1004 = sbr.rel (0) target = $region33
    $region32: #{tpu_custom_call.1} parent=1 // pred_region
      %s1006 = ssub.s32 8192, 8192
      %1007 = vsyncadd [#allocation5], %s1006
      %s1008 = sshll.u32 [#allocation8], 4
      %s1009 = int_to_ptr.vmem [resolvable:$true] %s1008
      %1014 = dma.vmem_to_hbm [thread:$0]  %s1009, 8192, %s3, [#allocation5], 512, 512, 32
    $region33: #{tpu_custom_call.1} parent=1 // pred_fallthru
      _
    // Predicated region
    $region34: #{tpu_custom_call.1} parent=1 // pred_check
      _
    $region35: #{tpu_custom_call.1} parent=1 // pred_check_branch
      %1016 = sbr.rel (0) target = $region37
    $region36: #{tpu_custom_call.1} parent=1 // pred_region
      %1017 = dma.done [#allocation5], 8192
    $region37: #{tpu_custom_call.1} parent=1 // pred_fallthru
      _
    %1018 = vsyncpa [#allocation4], 1
    %1019 = vsyncpa [#allocation7], 1
    %1020 = vsyncpa [#allocation5], 1

</llo_original>
